<compile_context>
chip_gen: v5e
topology: v5e:2x2
jax: 0.10.0
libtpu: 0.0.40
codegen_flags: <defaults>
</compile_context>

<pallas_src>
import jax
import jax.numpy as jnp
from jax.experimental import pallas as pl
from jax.experimental.pallas import tpu as pltpu


def _round_up(x, m):
    return (x + m - 1) // m * m


def _pick_tiles(rows, hw, itemsize, budget_bytes=2 << 20):
    """Pick (row_tile, hw_tile) for the flattened (N*C, H*W) view.

    row_tile: multiple of the sublane packing unit (8 f32 / 16 bf16 / 32 i8),
              capped at 8 packed vreg rows so the lane dim gets most of the budget.
    hw_tile : multiple of 128 lanes, sized so one block stays <= budget_bytes
              (~2 MiB -> 8 MiB double-buffered in+out, safe on all generations).
    Ragged edges in either dim are handled by Pallas masking (elementwise-safe).
    """
    sub = max(8, 32 // itemsize)
    lane = 128
    row_tile = min(_round_up(rows, sub), 8 * sub)
    max_lanes = max(lane, (budget_bytes // (row_tile * itemsize)) // lane * lane)
    hw_tile = min(_round_up(hw, lane), max_lanes)
    return row_tile, hw_tile


def _normalize_kernel(img_ref, params_ref, out_ref):
    # img_ref / out_ref : VMEM tiles of shape (row_tile, hw_tile)
    # params_ref        : (row_tile, 2) f32, col 0 = mean, col 1 = 1/std
    x = img_ref[...].astype(jnp.float32)
    mean = params_ref[:, 0:1]
    inv_std = params_ref[:, 1:2]
    out_ref[...] = ((x - mean) * inv_std).astype(out_ref.dtype)


def normalization_forward(img, mean, std, *, out_dtype=None):
    """img: (N, C, H, W); mean/std broadcastable to (1, C, 1, 1) (PyTorch param shape)."""
    N, C, H, W = img.shape
    HW = H * W
    rows = N * C
    out_dtype = img.dtype if out_dtype is None else out_dtype

    # Per-row parameter columns, fused into one (rows, 2) array.
    mean_c = jnp.asarray(mean).reshape(C).astype(jnp.float32)
    inv_std_c = (1.0 / jnp.asarray(std).reshape(C)).astype(jnp.float32)
    params = jnp.stack([jnp.tile(mean_c, N), jnp.tile(inv_std_c, N)], axis=-1)

    img2 = img.reshape(rows, HW)

    row_tile, hw_tile = _pick_tiles(rows, HW, jnp.dtype(img.dtype).itemsize)
    grid = (pl.cdiv(rows, row_tile), pl.cdiv(HW, hw_tile))

    out2 = pl.pallas_call(
        _normalize_kernel,
        out_shape=jax.ShapeDtypeStruct((rows, HW), out_dtype),
        grid=grid,
        in_specs=[
            pl.BlockSpec((row_tile, hw_tile), lambda r, s: (r, s)),
            pl.BlockSpec((row_tile, 2), lambda r, s: (r, 0)),
        ],
        out_specs=pl.BlockSpec((row_tile, hw_tile), lambda r, s: (r, s)),
        compiler_params=pltpu.CompilerParams(
            dimension_semantics=("parallel", "parallel"),
        ),
    )(img2, params)

    return out2.reshape(N, C, H, W)


if __name__ == "__main__":
    key = jax.random.PRNGKey(0)
    k_img, k_mean, k_std, k_img2 = jax.random.split(key, 4)

    # Primary check: divisible shapes (full-vreg, unmasked path).
    N, C, H, W = 2, 4, 16, 16
    img = jax.random.normal(k_img, (N, C, H, W), dtype=jnp.float32)
    mean = jax.random.normal(k_mean, (C,), dtype=jnp.float32).reshape(1, C, 1, 1)
    std = (jax.random.uniform(k_std, (C,), dtype=jnp.float32) + 0.5).reshape(1, C, 1, 1)

    out = normalization_forward(img, mean, std)
    out = jax.block_until_ready(out)
    ref = (img - mean) / std
    assert out.shape == (N, C, H, W)
    # Kernel multiplies by precomputed 1/std instead of dividing -> few-ulp slack.
    assert jnp.allclose(out, ref, atol=1e-5, rtol=1e-5)

    # Robustness check: ragged shapes (rows and HW not multiples of 8 / 128),
    # exercising the masked-edge path that replaced the old full-HW fallback.
    N2, C2, H2, W2 = 2, 3, 10, 10
    img_b = jax.random.normal(k_img2, (N2, C2, H2, W2), dtype=jnp.float32)
    mean_b = mean[:, :C2]
    std_b = std[:, :C2]
    out_b = jax.block_until_ready(normalization_forward(img_b, mean_b, std_b))
    ref_b = (img_b - mean_b) / std_b
    assert out_b.shape == (N2, C2, H2, W2)
    assert jnp.allclose(out_b, ref_b, atol=1e-5, rtol=1e-5)

    print("KERNEL_OK")
</pallas_src>

<mosaic_0001>
module attributes {stable_mosaic.version = 11 : i64} {
  func.func @_normalize_kernel(%arg0: i32, %arg1: i32, %arg2: memref<8x256xf32, #tpu.memory_space<vmem>>, %arg3: memref<8x2xf32, #tpu.memory_space<vmem>>, %arg4: memref<8x256xf32, #tpu.memory_space<vmem>>) attributes {dimension_semantics = [#tpu.dimension_semantics<parallel>, #tpu.dimension_semantics<parallel>], iteration_bounds = array<i64: 1, 1>, scalar_prefetch = 0 : i64, scratch_operands = 0 : i64, tpu.core_type = #tpu.core_type<tc>, window_params = [{transform_indices = @transform_0, window_bounds = array<i64: 8, 256>}, {transform_indices = @transform_1, window_bounds = array<i64: 8, 2>}, {transform_indices = @transform_2, window_bounds = array<i64: 8, 256>}]} {
    %c0 = arith.constant 0 : index
    %c0_0 = arith.constant 0 : index
    %0 = vector.load %arg2[%c0, %c0_0] : memref<8x256xf32, #tpu.memory_space<vmem>>, vector<8x256xf32>
    %c0_1 = arith.constant 0 : index
    %c0_2 = arith.constant 0 : index
    %1 = vector.load %arg3[%c0_1, %c0_2] : memref<8x2xf32, #tpu.memory_space<vmem>>, vector<8x1xf32>
    %c0_3 = arith.constant 0 : index
    %c1 = arith.constant 1 : index
    %2 = vector.load %arg3[%c0_3, %c1] : memref<8x2xf32, #tpu.memory_space<vmem>>, vector<8x1xf32>
    %3 = vector.broadcast %1 : vector<8x1xf32> to vector<8x256xf32>
    %4 = arith.subf %0, %3 : vector<8x256xf32>
    %5 = vector.broadcast %2 : vector<8x1xf32> to vector<8x256xf32>
    %6 = arith.mulf %4, %5 : vector<8x256xf32>
    %c0_4 = arith.constant 0 : index
    %c0_5 = arith.constant 0 : index
    %7 = vector.load %arg4[%c0_4, %c0_5] : memref<8x256xf32, #tpu.memory_space<vmem>>, vector<8x256xf32>
    tpu.vector_store %arg4[%c0_4, %c0_5], %6 {strides = array<i32>} : memref<8x256xf32, #tpu.memory_space<vmem>>, vector<8x256xf32>,
    return
  }
  func.func @transform_0(%arg0: i32, %arg1: i32) -> (i32, i32) {
    %c0_i32 = arith.constant 0 : i32
    return %arg0, %arg1 : i32, i32
  }
  func.func @transform_1(%arg0: i32, %arg1: i32) -> (i32, i32) {
    %c0_i32 = arith.constant 0 : i32
    %c0_i32_0 = arith.constant 0 : i32
    return %arg0, %c0_i32 : i32, i32
  }
  func.func @transform_2(%arg0: i32, %arg1: i32) -> (i32, i32) {
    %c0_i32 = arith.constant 0 : i32
    return %arg0, %arg1 : i32, i32
  }
}

</mosaic_0001>

<llo_original>
// kernel: tpu_custom_call.1
$region0: #{tpu_custom_call.1}
  #allocation0 [shape = 'u32[]', space=smem, size = 0x4, offset = 0x4, fixed_abs, tag = 'smem constant byte address 0x4 - core index']
  #allocation1 [shape = 'u32[72,128]{1,0:T(1,128)}', space=vmem, size = 0x9000, scoped, tag = 'internal scratch']
  %s0 = inlined_call_operand.hbm [shape: f32[8,256], index: 0, kind: input, shape index: {}]
  %s1 = inlined_call_operand.vmem [shape: f32[8,2], index: 1, kind: input, shape index: {}]
  %s2 = inlined_call_operand.hbm [shape: f32[8,256], index: 2, kind: output, shape index: {}]
  %s3 = sld [smem:[#allocation0]]
  $region22: #{tpu_custom_call.1} parent=0
    _
  %s5 = ssub.s32 1, %s3
  %s6 = scalar_select 0, %s5, %s3
  $region1: #{tpu_custom_call.1} parent=0
    #allocation2 [shape = 'u8[8192]{0}', space=vmem, size = 0x2000, scoped, tag = 'input window, operand 0, single buffered']
    #allocation3 [shape = 's32[1]{0}', space=sflag, size = 0x4, scoped, tag = 'scoped memory for tpu_custom_call.1']
    #allocation4 [shape = 's32[1]{0}', space=sflag, size = 0x4, scoped, tag = 'scoped memory for tpu_custom_call.1']
    #allocation5 [shape = 'u8[8192]{0}', space=vmem, size = 0x2000, scoped, tag = 'output window, operand 0, single buffered']
    %7 = vsyncpa [#allocation3], 0
    %8 = vsyncpa [#allocation4], 0
    // Predicated region
    $region2: #{tpu_custom_call.1} parent=1 // pred_check
      _
    $region3: #{tpu_custom_call.1} parent=1 // pred_check_branch
      %10 = sbr.rel (0) target = $region5
    $region4: #{tpu_custom_call.1} parent=1 // pred_region
      %12 = vsyncadd [#allocation3], 0
      %s14 = sshll.u32 %s0, 4
      %s15 = int_to_ptr.hbm [resolvable:$true] %s14
      %s16 = sshll.u32 [#allocation2], 4
      %s17 = int_to_ptr.vmem [resolvable:$true] %s16
      %19 = dma.hbm_to_vmem [thread:$0]  %s15, 256, %s17, [#allocation3]
    $region5: #{tpu_custom_call.1} parent=1 // pred_fallthru
      _
    // Predicated region
    $region6: #{tpu_custom_call.1} parent=1 // pred_check
      _
    $region7: #{tpu_custom_call.1} parent=1 // pred_check_branch
      %21 = sbr.rel (0) target = $region9
    $region8: #{tpu_custom_call.1} parent=1 // pred_region
      _
    $region9: #{tpu_custom_call.1} parent=1 // pred_fallthru
      _
    // Predicated region
    $region10: #{tpu_custom_call.1} parent=1 // pred_check
      _
    $region11: #{tpu_custom_call.1} parent=1 // pred_check_branch
      %23 = sbr.rel (0) target = $region13
    $region12: #{tpu_custom_call.1} parent=1 // pred_region
      %25 = dma.done [#allocation3], 256
    $region13: #{tpu_custom_call.1} parent=1 // pred_fallthru
      _
    %v26 = vld [vmem:[#allocation2] sm:$0xff]
    %v27 = vld [vmem:[#allocation2 + $0x8] sm:$0xff]
    %v28 = vld [vmem:[%s1] sm:$0xff]
    %30 = vset.pattern.permute.xlu0 0
    %31 = vperm.xlu0 %30, %v28
    %v32 = vpop.permute.xlu0 %31
    %v34 = vsub.f32 %v26, %v32
    %v35 = vsub.f32 %v27, %v32
    %36 = vset.pattern.permute.xlu0 1
    %37 = vperm.xlu0 %36, %v28
    %v38 = vpop.permute.xlu0 %37
    %v40 = vmul.f32 %v34, %v38
    %v41 = vmul.f32 %v35, %v38
    %42 = vst [vmem:[#allocation5] sm:$0xff] %v40
    %43 = vst [vmem:[#allocation5 + $0x8] sm:$0xff] %v41
    // Predicated region
    $region14: #{tpu_custom_call.1} parent=1 // pred_check
      _
    $region15: #{tpu_custom_call.1} parent=1 // pred_check_branch
      %45 = sbr.rel (0) target = $region17
    $region16: #{tpu_custom_call.1} parent=1 // pred_region
      %47 = vsyncadd [#allocation4], 0
      %s49 = sshll.u32 [#allocation5], 4
      %s50 = int_to_ptr.vmem [resolvable:$true] %s49
      %s51 = sshll.u32 %s2, 4
      %s52 = int_to_ptr.hbm [resolvable:$true] %s51
      %54 = dma.vmem_to_hbm [thread:$0]  %s50, 256, %s52, [#allocation4]
    $region17: #{tpu_custom_call.1} parent=1 // pred_fallthru
      _
    // Predicated region
    $region18: #{tpu_custom_call.1} parent=1 // pred_check
      _
    $region19: #{tpu_custom_call.1} parent=1 // pred_check_branch
      %56 = sbr.rel (0) target = $region21
    $region20: #{tpu_custom_call.1} parent=1 // pred_region
      %58 = dma.done [#allocation4], 256
    $region21: #{tpu_custom_call.1} parent=1 // pred_fallthru
      _
    %59 = vsyncpa [#allocation3], 1
    %60 = vsyncpa [#allocation4], 1

</llo_original>
